<compile_context>
chip_gen: v6e
topology: v6e:2x2x1
jax: 0.10.0
libtpu: 0.0.40
codegen_flags: <defaults>
</compile_context>

<pallas_src>
import functools

import jax
import jax.numpy as jnp
from jax.experimental import pallas as pl
from jax.experimental.pallas import tpu as pltpu


def mlloss_kernel(emb_ref, kern_ref, inv_e_ref, inv_w_ref, out_ref, *, s):
    """One (tm, tn) output tile.

    emb_ref:   (tm, K)  float32  raw embeddings rows (full feature dim)
    kern_ref:  (K, tn)  float32  raw weight columns  (full feature dim)
    inv_e_ref: (tm, 1)  float32  1 / ||emb_row||_2   (precomputed)
    inv_w_ref: (1, tn)  float32  1 / ||ker_col||_2   (precomputed)
    out_ref:   (tm, tn) float32
    """
    # bf16 inputs to the MXU, f32 accumulation.
    a = emb_ref[...].astype(jnp.bfloat16)
    b = kern_ref[...].astype(jnp.bfloat16)
    acc = jnp.dot(a, b, preferred_element_type=jnp.float32)          # (tm, tn)

    # Fold the row/col L2 normalization in as post-matmul broadcast scales
    # (mathematically identical to normalizing the operands first).
    cos = acc * inv_e_ref[...] * inv_w_ref[...]                      # f32 epilogue
    out_ref[...] = (jnp.clip(cos, -1.0, 1.0) * s).astype(out_ref.dtype)


def _choose_tile(dim, target, align):
    """Largest `align`-aligned tile <= target that divides dim, else full dim."""
    if dim <= target:
        return dim                      # full extent -> always a legal block
    t = (target // align) * align
    while t >= align:
        if dim % t == 0:
            return t
        t -= align
    return dim                          # fall back to full extent (always legal)


def ml_loss_forward(embeddings, kernel, label=None, *, s=64.0, tm=256, tn=512):
    """Pallas implementation of MLLoss.forward.

    embeddings: (B, in_features) float32
    kernel:     (in_features, out_features) float32  (the module's self.kernel)
    label:      unused by the reference forward (kept for signature parity)
    Returns cos_theta of shape (B, out_features), float32.
    """
    del label  # MLLoss.forward never uses `label`.

    emb = embeddings.astype(jnp.float32)
    ker = kernel.astype(jnp.float32)
    B, K = emb.shape
    K2, N = ker.shape
    assert K == K2, "feature dims must match"

    tm = _choose_tile(B, tm, 8)      # sublane-aligned row tile
    tn = _choose_tile(N, tn, 128)    # lane-aligned (lane-dense) column tile

    # Tiny precomputed inverse norms (single pass over each operand, EUP rsqrt).
    inv_e = jax.lax.rsqrt(jnp.sum(emb * emb, axis=1, keepdims=True))  # (B, 1)
    inv_w = jax.lax.rsqrt(jnp.sum(ker * ker, axis=0, keepdims=True))  # (1, N)

    grid = (B // tm, N // tn)
    return pl.pallas_call(
        functools.partial(mlloss_kernel, s=float(s)),
        out_shape=jax.ShapeDtypeStruct((B, N), jnp.float32),
        grid_spec=pl.GridSpec(
            grid=grid,
            in_specs=[
                pl.BlockSpec((tm, K), lambda i, j: (i, 0)),   # embeddings rows
                pl.BlockSpec((K, tn), lambda i, j: (0, j)),   # weight columns
                pl.BlockSpec((tm, 1), lambda i, j: (i, 0)),   # 1/||row||
                pl.BlockSpec((1, tn), lambda i, j: (0, j)),   # 1/||col||
            ],
            out_specs=pl.BlockSpec((tm, tn), lambda i, j: (i, j)),
        ),
        compiler_params=pltpu.CompilerParams(
            dimension_semantics=("parallel", "parallel"),
            vmem_limit_bytes=32 * 1024 * 1024,  # tiles stay a few MiB: fits v7x's 64 MiB VMEM
        ),
    )(emb, ker, inv_e, inv_w)


def _reference(emb, ker, s):
    e_n = emb / jnp.linalg.norm(emb, axis=1, keepdims=True)
    w_n = ker / jnp.linalg.norm(ker, axis=0, keepdims=True)
    return jnp.clip(e_n @ w_n, -1.0, 1.0) * s


if __name__ == "__main__":
    s_param = 64.0  # MLLoss default
    key = jax.random.PRNGKey(0)
    k1, k2, k3, k4, k5 = jax.random.split(key, 5)

    # Tolerance sized for bf16 MXU inputs on logits scaled by s.
    tol = 1e-2 * s_param

    # --- case 1: small shapes consistent with the module -------------------
    B, in_features, out_features = 8, 32, 128
    embeddings = jax.random.normal(k1, (B, in_features), dtype=jnp.float32)
    kernel = 0.01 * jax.random.normal(k2, (in_features, out_features),
                                      dtype=jnp.float32)   # externally-set self.kernel
    label = jax.random.randint(k3, (B,), 0, out_features, dtype=jnp.int32)  # unused

    cos_theta = ml_loss_forward(embeddings, kernel, label, s=s_param)
    jax.block_until_ready(cos_theta)

    ref = _reference(embeddings, kernel, s_param)
    assert cos_theta.shape == (B, out_features)
    assert float(jnp.max(jnp.abs(cos_theta - ref))) <= tol, "cos_theta mismatch (case 1)"

    # --- case 2: force a multi-tile (2, 2) grid to exercise index maps -----
    B2, K2f, N2 = 16, 64, 256
    emb2 = jax.random.normal(k4, (B2, K2f), dtype=jnp.float32)
    ker2 = 0.01 * jax.random.normal(k5, (K2f, N2), dtype=jnp.float32)
    out2 = ml_loss_forward(emb2, ker2, None, s=s_param, tm=8, tn=128)
    jax.block_until_ready(out2)
    ref2 = _reference(emb2, ker2, s_param)
    assert float(jnp.max(jnp.abs(out2 - ref2))) <= tol, "cos_theta mismatch (case 2)"

    print("KERNEL_OK")
</pallas_src>

<mosaic_0001>
module attributes {stable_mosaic.version = 11 : i64} {
  func.func @mlloss_kernel(%arg0: i32, %arg1: i32, %arg2: memref<8x32xf32, #tpu.memory_space<vmem>>, %arg3: memref<32x128xf32, #tpu.memory_space<vmem>>, %arg4: memref<8x1xf32, #tpu.memory_space<vmem>>, %arg5: memref<1x128xf32, #tpu.memory_space<vmem>>, %arg6: memref<8x128xf32, #tpu.memory_space<vmem>>) attributes {dimension_semantics = [#tpu.dimension_semantics<parallel>, #tpu.dimension_semantics<parallel>], iteration_bounds = array<i64: 1, 1>, scalar_prefetch = 0 : i64, scratch_operands = 0 : i64, tpu.core_type = #tpu.core_type<tc>, window_params = [{transform_indices = @transform_0, window_bounds = array<i64: 8, 32>}, {transform_indices = @transform_1, window_bounds = array<i64: 32, 128>}, {transform_indices = @transform_2, window_bounds = array<i64: 8, 1>}, {transform_indices = @transform_3, window_bounds = array<i64: 1, 128>}, {transform_indices = @transform_4, window_bounds = array<i64: 8, 128>}]} {
    %c0 = arith.constant 0 : index
    %c0_0 = arith.constant 0 : index
    %0 = vector.load %arg2[%c0, %c0_0] : memref<8x32xf32, #tpu.memory_space<vmem>>, vector<8x32xf32>
    %1 = arith.truncf %0 : vector<8x32xf32> to vector<8x32xbf16>
    %c0_1 = arith.constant 0 : index
    %c0_2 = arith.constant 0 : index
    %2 = vector.load %arg3[%c0_1, %c0_2] : memref<32x128xf32, #tpu.memory_space<vmem>>, vector<32x128xf32>
    %3 = arith.truncf %2 : vector<32x128xf32> to vector<32x128xbf16>
    %cst = arith.constant dense<0.000000e+00> : vector<8x128xf32>
    %4 = tpu.matmul %1, %3, %cst {dimension_numbers = #tpu.dot_dimension_numbers<[1], [0], [0], [1], [0, 0, 1, 1], [], []>} : vector<8x32xbf16>, vector<32x128xbf16>, vector<8x128xf32> -> vector<8x128xf32>
    %c0_3 = arith.constant 0 : index
    %c0_4 = arith.constant 0 : index
    %5 = vector.load %arg4[%c0_3, %c0_4] : memref<8x1xf32, #tpu.memory_space<vmem>>, vector<8x1xf32>
    %6 = vector.broadcast %5 : vector<8x1xf32> to vector<8x128xf32>
    %7 = arith.mulf %4, %6 : vector<8x128xf32>
    %c0_5 = arith.constant 0 : index
    %c0_6 = arith.constant 0 : index
    %8 = vector.load %arg5[%c0_5, %c0_6] : memref<1x128xf32, #tpu.memory_space<vmem>>, vector<1x128xf32>
    %9 = vector.broadcast %8 : vector<1x128xf32> to vector<8x128xf32>
    %10 = arith.mulf %7, %9 : vector<8x128xf32>
    %cst_7 = arith.constant -1.000000e+00 : f32
    %cst_8 = arith.constant 1.000000e+00 : f32
    %11 = vector.broadcast %cst_7 : f32 to vector<8x128xf32>
    %12 = arith.maximumf %11, %10 : vector<8x128xf32>
    %13 = vector.broadcast %cst_8 : f32 to vector<8x128xf32>
    %14 = arith.minimumf %13, %12 : vector<8x128xf32>
    %cst_9 = arith.constant 6.400000e+01 : f32
    %15 = vector.broadcast %cst_9 : f32 to vector<8x128xf32>
    %16 = arith.mulf %14, %15 : vector<8x128xf32>
    %c0_10 = arith.constant 0 : index
    %c0_11 = arith.constant 0 : index
    %17 = vector.load %arg6[%c0_10, %c0_11] : memref<8x128xf32, #tpu.memory_space<vmem>>, vector<8x128xf32>
    tpu.vector_store %arg6[%c0_10, %c0_11], %16 {strides = array<i32>} : memref<8x128xf32, #tpu.memory_space<vmem>>, vector<8x128xf32>,
    return
  }
  func.func @transform_0(%arg0: i32, %arg1: i32) -> (i32, i32) {
    %c0_i32 = arith.constant 0 : i32
    %c0_i32_0 = arith.constant 0 : i32
    return %arg0, %c0_i32 : i32, i32
  }
  func.func @transform_1(%arg0: i32, %arg1: i32) -> (i32, i32) {
    %c0_i32 = arith.constant 0 : i32
    %c0_i32_0 = arith.constant 0 : i32
    return %c0_i32, %arg1 : i32, i32
  }
  func.func @transform_2(%arg0: i32, %arg1: i32) -> (i32, i32) {
    %c0_i32 = arith.constant 0 : i32
    %c0_i32_0 = arith.constant 0 : i32
    return %arg0, %c0_i32 : i32, i32
  }
  func.func @transform_3(%arg0: i32, %arg1: i32) -> (i32, i32) {
    %c0_i32 = arith.constant 0 : i32
    %c0_i32_0 = arith.constant 0 : i32
    return %c0_i32, %arg1 : i32, i32
  }
  func.func @transform_4(%arg0: i32, %arg1: i32) -> (i32, i32) {
    %c0_i32 = arith.constant 0 : i32
    return %arg0, %arg1 : i32, i32
  }
}

</mosaic_0001>

<llo_original>
// kernel: tpu_custom_call.1
$region0: #{tpu_custom_call.1}
  #allocation0 [shape = 'u32[]', space=smem, size = 0x4, offset = 0x4, fixed_abs, tag = 'smem constant byte address 0x4 - core index']
  #allocation1 [shape = 'u32[144,128]{1,0:T(1,128)}', space=vmem, size = 0x12000, scoped, tag = 'internal scratch']
  %s0 = inlined_call_operand.vmem [shape: f32[8,32], index: 0, kind: input, shape index: {}]
  %s1 = inlined_call_operand.hbm [shape: f32[32,128], index: 1, kind: input, shape index: {}]
  %s2 = inlined_call_operand.vmem [shape: f32[8,1], index: 2, kind: input, shape index: {}]
  %s3 = inlined_call_operand.vmem [shape: f32[1,128], index: 3, kind: input, shape index: {}]
  %s4 = inlined_call_operand.hbm [shape: f32[8,128], index: 4, kind: output, shape index: {}]
  %s5 = sld [smem:[#allocation0]]
  $region30: #{tpu_custom_call.1} parent=0
    _
  %s7 = ssub.s32 1, %s5
  %s8 = scalar_select 0, %s7, %s5
  $region1: #{tpu_custom_call.1} parent=0
    #allocation2 [shape = 'u8[16384]{0}', space=vmem, size = 0x4000, scoped, tag = 'input window, operand 1, single buffered']
    #allocation3 [shape = 's32[1]{0}', space=sflag, size = 0x4, scoped, tag = 'scoped memory for tpu_custom_call.1']
    #allocation4 [shape = 's32[1]{0}', space=sflag, size = 0x4, scoped, tag = 'scoped memory for tpu_custom_call.1']
    #allocation5 [shape = 'u8[4096]{0}', space=vmem, size = 0x1000, scoped, tag = 'output window, operand 0, single buffered']
    %9 = vsyncpa [#allocation3], 0
    %10 = vsyncpa [#allocation4], 0
    // Predicated region
    $region2: #{tpu_custom_call.1} parent=1 // pred_check
      _
    $region3: #{tpu_custom_call.1} parent=1 // pred_check_branch
      %12 = sbr.rel (0) target = $region5
    $region4: #{tpu_custom_call.1} parent=1 // pred_region
      _
    $region5: #{tpu_custom_call.1} parent=1 // pred_fallthru
      _
    // Predicated region
    $region6: #{tpu_custom_call.1} parent=1 // pred_check
      _
    $region7: #{tpu_custom_call.1} parent=1 // pred_check_branch
      %14 = sbr.rel (0) target = $region9
    $region8: #{tpu_custom_call.1} parent=1 // pred_region
      %s16 = ssub.s32 512, 512
      %17 = vsyncadd [#allocation3], %s16
      %s18 = sshll.u32 [#allocation2], 4
      %s19 = int_to_ptr.vmem [resolvable:$true] %s18
      %24 = dma.hbm_to_vmem [thread:$0]  %s1, 512, %s19, [#allocation3], 128, 128, 8
    $region9: #{tpu_custom_call.1} parent=1 // pred_fallthru
      _
    // Predicated region
    $region10: #{tpu_custom_call.1} parent=1 // pred_check
      _
    $region11: #{tpu_custom_call.1} parent=1 // pred_check_branch
      %26 = sbr.rel (0) target = $region13
    $region12: #{tpu_custom_call.1} parent=1 // pred_region
      _
    $region13: #{tpu_custom_call.1} parent=1 // pred_fallthru
      _
    // Predicated region
    $region14: #{tpu_custom_call.1} parent=1 // pred_check
      _
    $region15: #{tpu_custom_call.1} parent=1 // pred_check_branch
      %28 = sbr.rel (0) target = $region17
    $region16: #{tpu_custom_call.1} parent=1 // pred_region
      _
    $region17: #{tpu_custom_call.1} parent=1 // pred_fallthru
      _
    // Predicated region
    $region18: #{tpu_custom_call.1} parent=1 // pred_check
      _
    $region19: #{tpu_custom_call.1} parent=1 // pred_check_branch
      %30 = sbr.rel (0) target = $region21
    $region20: #{tpu_custom_call.1} parent=1 // pred_region
      %31 = dma.done [#allocation3], 512
    $region21: #{tpu_custom_call.1} parent=1 // pred_fallthru
      _
    %v33 = vld [vmem:[%s0] sm:$0xff]
    %v34 = vpack.c.bf16 %v33, %v33
    %v35 = vld [vmem:[#allocation2] sm:$0xff]
    %v36 = vld [vmem:[#allocation2 + $0x8] sm:$0xff]
    %v37 = vld [vmem:[#allocation2 + $0x10] sm:$0xff]
    %v38 = vld [vmem:[#allocation2 + $0x18] sm:$0xff]
    %v39 = vpack.c.bf16 %v36, %v35
    %v40 = vpack.c.bf16 %v38, %v37
    %vm41 = vcmask 261120
    %v43 = vsel %vm41, %v34, 0
    %45 = vmatprep.subr.bf16.mxu0 0
    %46 = vmatpush1.bf16.msra.mxu0 0
    %47 = vmatprep.subr.bf16.mxu0 0
    %48 = vmatpush1.bf16.msra.mxu0 0
    %49 = vmatprep.subr.bf16.mxu0 0
    %50 = vmatpush1.bf16.msra.mxu0 0
    %51 = vmatprep.subr.bf16.mxu0 0
    %52 = vmatpush1.bf16.msra.mxu0 0
    %53 = vmatprep.subr.bf16.mxu0 0
    %54 = vmatpush1.bf16.msra.mxu0 0
    %55 = vmatprep.subr.bf16.mxu0 0
    %56 = vmatpush1.bf16.msra.mxu0 0
    %57 = vmatprep.subr.bf16.mxu0 0
    %58 = vmatpush1.bf16.msra.mxu0 %v40
    %59 = vmatprep.subr.bf16.mxu0 0
    %60 = vmatpush1.bf16.msra.mxu0 %v39
    %61 = vmatprep.subr.bf16.mxu0 0
    %62 = vmatpush2.bf16.msra.mxu0 0
    %63 = vmatprep.subr.bf16.mxu0 0
    %64 = vmatpush2.bf16.msra.mxu0 0
    %65 = vmatprep.subr.bf16.mxu0 0
    %66 = vmatpush2.bf16.msra.mxu0 0
    %67 = vmatprep.subr.bf16.mxu0 0
    %68 = vmatpush2.bf16.msra.mxu0 0
    %69 = vmatprep.subr.bf16.mxu0 0
    %70 = vmatpush2.bf16.msra.mxu0 0
    %71 = vmatprep.subr.bf16.mxu0 0
    %72 = vmatpush2.bf16.msra.mxu0 0
    %73 = vmatprep.subr.bf16.mxu0 0
    %74 = vmatpush2.bf16.msra.mxu0 0
    %75 = vmatprep.subr.bf16.mxu0 0
    %76 = vmatpush2.bf16.msra.mxu0 0
    %77 = vmatprep.mubr.bf16.mxu0 0
    %78 = vmatmul.mubr.bf16.gmra.mxu0 %v43
    %v79 = vpop.f32.mrf.mxu0
    %v80 = vadd.f32 0.0, %v79
    %v81 = vpop.f32.mrf.mxu0
    %v82 = vpop.f32.mrf.mxu0
    %v83 = vpop.f32.mrf.mxu0
    %84 = vdwg.mxu0
    %v85 = vld [vmem:[%s2] sm:$0xff]
    %87 = vset.pattern.permute.xlu0 0
    %88 = vperm.xlu0 %87, %v85
    %v89 = vpop.permute.xlu0 %88
    %v91 = vmul.f32 %v80, %v89
    %v92 = vld [vmem:[%s3] sm:$0x1]
    %v94 = vlaneseq
    %v95 = vshrl.u32 %v94, 7
    %v96 = vsub.s32 0, %v95
    %v97 = vrot.slane %v92, %v96
    %v99 = vmul.f32 %v91, %v97
    %v100 = vmax.f32 %v99, -1.0
    %v101 = vmin.f32 %v100, 1.0
    %v102 = vmul.f32 %v101, 64.0
    %103 = vst [vmem:[#allocation5] sm:$0xff] %v102
    // Predicated region
    $region22: #{tpu_custom_call.1} parent=1 // pred_check
      _
    $region23: #{tpu_custom_call.1} parent=1 // pred_check_branch
      %105 = sbr.rel (0) target = $region25
    $region24: #{tpu_custom_call.1} parent=1 // pred_region
      %s107 = ssub.s32 128, 128
      %108 = vsyncadd [#allocation4], %s107
      %s110 = sshll.u32 [#allocation5], 4
      %s111 = int_to_ptr.vmem [resolvable:$true] %s110
      %113 = dma.vmem_to_hbm [thread:$0]  %s111, 128, %s4, [#allocation4]
    $region25: #{tpu_custom_call.1} parent=1 // pred_fallthru
      _
    // Predicated region
    $region26: #{tpu_custom_call.1} parent=1 // pred_check
      _
    $region27: #{tpu_custom_call.1} parent=1 // pred_check_branch
      %115 = sbr.rel (0) target = $region29
    $region28: #{tpu_custom_call.1} parent=1 // pred_region
      %116 = dma.done [#allocation4], 128
    $region29: #{tpu_custom_call.1} parent=1 // pred_fallthru
      _
    %117 = vsyncpa [#allocation3], 1
    %118 = vsyncpa [#allocation4], 1

</llo_original>
